<compile_context>
chip_gen: v5e
topology: v5e:2x2
jax: 0.10.0
libtpu: 0.0.40
codegen_flags: <defaults>
</compile_context>

<pallas_src>
import jax
import jax.numpy as jnp
import numpy as np
from jax import lax
from jax.experimental import pallas as pl
from jax.experimental.pallas import tpu as pltpu

# ----------------------------- configuration --------------------------------
X_DIM, Y_DIM = 8, 8          # x_dim, y_dim
R_DIM, Z_DIM, H_DIM = 32, 32, 32
N_CTX, N_TGT = 16, 16        # context / target sequence lengths
BATCH = 2
# num_layers_* = 2  ->  mlp == Linear(h,h) -> ReLU -> Linear(h,h)
# is_attentive = False, has_latent_path = True, has_deterministic_path = True
# non_linearity = "ReLU"

# --------------------- packed-weight slab layout ------------------------------
_PACK_W = 128  # lane width of the packed parameter slab (full lane tile)


def _build_layout():
    entries = [
        # name,      (rows, cols)
        ("enc_in",   (X_DIM + Y_DIM, 2 * H_DIM)),       # [x;y] -> [LE h | DE h]
        ("enc_b0",   (1, 2 * H_DIM)),
        ("enc_w1",   (2 * H_DIM, 2 * H_DIM)),           # blockdiag(LE w1, DE w1)
        ("enc_b1",   (1, 2 * H_DIM)),
        ("enc_w2",   (2 * H_DIM, 2 * H_DIM)),           # blockdiag(LE w2, DE w2)
        ("enc_b2",   (1, 2 * H_DIM)),
        ("pool_w",   (2 * H_DIM, 2 * Z_DIM + R_DIM)),   # pooled -> [zmu|zw|r]
        ("pool_b",   (1, 2 * Z_DIM + R_DIM)),
        ("dec_wx",   (X_DIM, H_DIM)),
        ("dec_wrz",  (R_DIM + Z_DIM, H_DIM)),           # [r ; z] -> h
        ("dec_b0",   (1, H_DIM)),
        ("dec_w1",   (H_DIM, H_DIM)),
        ("dec_b1",   (1, H_DIM)),
        ("dec_w2",   (H_DIM, H_DIM)),
        ("dec_b2",   (1, H_DIM)),
        ("dec_wh",   (H_DIM, 2 * Y_DIM)),               # h -> [y_mu | y_w]
        ("dec_bh",   (1, 2 * Y_DIM)),
    ]
    off = {}
    r = 0
    for name, (rows, cols) in entries:
        off[name] = (r, rows, cols)
        r += -(-rows // 8) * 8     # next entry starts at an 8-aligned row
    return off, r


_LAYOUT, _PACK_ROWS = _build_layout()


def pack_params(p):
    """Pack the 32 original (torch-layout-transposed) params into one slab."""
    (le_wx, le_wy, le_bin, le_w1, le_b1, le_w2, le_b2,
     le_wzmu, le_bzmu, le_wzw, le_bzw,
     de_wx, de_wy, de_bin, de_w1, de_b1, de_w2, de_b2, de_wout, de_bout,
     dc_wx, dc_wr, dc_wz, dc_bin, dc_w1, dc_b1, dc_w2, dc_b2,
     dc_wmu, dc_bmu, dc_ww, dc_bw) = [np.asarray(a, np.float32) for a in p]

    slab = np.zeros((_PACK_ROWS, _PACK_W), np.float32)

    def put(name, mat):
        r0, rows, cols = _LAYOUT[name]
        assert mat.shape == (rows, cols), (name, mat.shape, (rows, cols))
        slab[r0:r0 + rows, :cols] = mat

    zH = np.zeros((H_DIM, H_DIM), np.float32)
    # fused (latent | deterministic) encoder
    put("enc_in", np.block([[le_wx, de_wx], [le_wy, de_wy]]))
    put("enc_b0", np.concatenate([le_bin, de_bin], axis=1))
    put("enc_w1", np.block([[le_w1, zH], [zH, de_w1]]))
    put("enc_b1", np.concatenate([le_b1, de_b1], axis=1))
    put("enc_w2", np.block([[le_w2, zH], [zH, de_w2]]))
    put("enc_b2", np.concatenate([le_b2, de_b2], axis=1))
    # pooled heads: s_mean -> [z_mu | z_w], h_mean -> r_mean
    pool_w = np.zeros((2 * H_DIM, 2 * Z_DIM + R_DIM), np.float32)
    pool_w[:H_DIM, :Z_DIM] = le_wzmu
    pool_w[:H_DIM, Z_DIM:2 * Z_DIM] = le_wzw
    pool_w[H_DIM:, 2 * Z_DIM:] = de_wout
    put("pool_w", pool_w)
    put("pool_b", np.concatenate([le_bzmu, le_bzw, de_bout], axis=1))
    # decoder
    put("dec_wx", dc_wx)
    put("dec_wrz", np.concatenate([dc_wr, dc_wz], axis=0))
    put("dec_b0", dc_bin)
    put("dec_w1", dc_w1)
    put("dec_b1", dc_b1)
    put("dec_w2", dc_w2)
    put("dec_b2", dc_b2)
    put("dec_wh", np.concatenate([dc_wmu, dc_ww], axis=1))
    put("dec_bh", np.concatenate([dc_bmu, dc_bw], axis=1))
    return jnp.asarray(slab)


# ------------------------- explicit non-linearities ---------------------------
def _sigmoid(x):
    return 1.0 / (1.0 + jnp.exp(-x))


def _softplus(x):
    # numerically-stable softplus: max(x,0) + log(1 + exp(-|x|))
    return jnp.maximum(x, 0.0) + jnp.log(1.0 + jnp.exp(-jnp.abs(x)))


# ------------------------------- kernel --------------------------------------
def _np_forward_kernel(xc_ref, yc_ref, xt_ref, eps_z_ref, eps_y_ref, w_ref,
                       out_y_ref, out_z_ref):
    def dot(a, b):
        return jnp.dot(a, b, preferred_element_type=jnp.float32)

    def w(name):
        r0, rows, cols = _LAYOUT[name]
        return w_ref[r0:r0 + rows, 0:cols]

    xc = xc_ref[...]          # (B*N_CTX, X)
    yc = yc_ref[...]          # (B*N_CTX, Y)
    xt = xt_ref[...]          # (B*N_TGT, X)
    eps_z = eps_z_ref[...]    # (B, Z)
    eps_y = eps_y_ref[...]    # (B*N_TGT, Y)

    bn_ctx = xc.shape[0]
    bn_tgt = xt.shape[0]
    b = eps_z.shape[0]
    n_ctx = bn_ctx // b
    n_tgt = bn_tgt // b

    # -------- fused (latent | deterministic) encoder: 64-wide hidden --------
    w_in = w("enc_in")                                       # (X+Y, 2H)
    e = dot(xc, w_in[:X_DIM]) + dot(yc, w_in[X_DIM:]) + w("enc_b0")
    e = dot(e, w("enc_w1")) + w("enc_b1")
    e = jnp.maximum(e, 0.0)                                  # ReLU
    e = dot(e, w("enc_w2")) + w("enc_b2")                    # (B*N_CTX, 2H)

    # per-batch mean pooling over the context, via a 0/1 selection matmul
    prow = lax.broadcasted_iota(jnp.int32, (b, bn_ctx), 0)   # batch index
    pcol = lax.broadcasted_iota(jnp.int32, (b, bn_ctx), 1)   # flat ctx index
    pool_mask = ((pcol >= prow * n_ctx) &
                 (pcol < (prow + 1) * n_ctx)).astype(jnp.float32)
    pooled = dot(pool_mask, e) * (1.0 / n_ctx)               # (B, 2H)

    # fused heads on the pooled features: [z_mu | z_w | r_mean]
    ph = dot(pooled, w("pool_w")) + w("pool_b")              # (B, 2Z+R)
    z_mu = ph[:, :Z_DIM]
    z_w = ph[:, Z_DIM:2 * Z_DIM]
    r_mean = ph[:, 2 * Z_DIM:]
    z_std = 0.1 + 0.9 * _sigmoid(z_w)
    z = z_mu + z_std * eps_z                                 # (B, Z)

    # ------------------------------ decoder ---------------------------------
    w_rz = w("dec_wrz")                                      # (R+Z, H)
    per_b = dot(r_mean, w_rz[:R_DIM]) + dot(z, w_rz[R_DIM:]) + w("dec_b0")

    # broadcast the per-batch contribution to every target row (0/1 matmul)
    trow = lax.broadcasted_iota(jnp.int32, (bn_tgt, b), 0)   # flat tgt index
    tcol = lax.broadcasted_iota(jnp.int32, (bn_tgt, b), 1)   # batch index
    sel = ((trow >= tcol * n_tgt) &
           (trow < (tcol + 1) * n_tgt)).astype(jnp.float32)
    hd = dot(xt, w("dec_wx")) + dot(sel, per_b)              # (B*N_TGT, H)

    hd = dot(hd, w("dec_w1")) + w("dec_b1")
    hd = jnp.maximum(hd, 0.0)
    hd = dot(hd, w("dec_w2")) + w("dec_b2")
    heads = dot(hd, w("dec_wh")) + w("dec_bh")               # (B*N_TGT, 2Y)
    y_mu = heads[:, :Y_DIM]
    y_w = heads[:, Y_DIM:]
    y_std = 0.1 + 0.9 * _softplus(y_w)
    y = y_mu + y_std * eps_y

    # consolidated outputs: one y-array, one z-array
    out_y_ref[0] = y
    out_y_ref[1] = y_mu
    out_y_ref[2] = y_std
    out_z_ref[0] = z
    out_z_ref[1] = z_mu
    out_z_ref[2] = z_std


# ------------------------------ wrapper ---------------------------------------
def neural_process_forward(x_context, y_context, x_target, eps_z, eps_y, packed_w):
    b, n_ctx, _ = x_context.shape
    n_tgt = x_target.shape[1]

    xc = x_context.reshape(b * n_ctx, X_DIM)
    yc = y_context.reshape(b * n_ctx, Y_DIM)
    xt = x_target.reshape(b * n_tgt, X_DIM)
    ey = eps_y.reshape(b * n_tgt, Y_DIM)

    # Everything is tiny: place each array fully in VMEM, single grid step.
    vmem = pl.BlockSpec(memory_space=pltpu.MemorySpace.VMEM)

    out_y, out_z = pl.pallas_call(
        _np_forward_kernel,
        in_specs=[vmem] * 6,
        out_specs=(vmem, vmem),
        out_shape=(
            jax.ShapeDtypeStruct((3, b * n_tgt, Y_DIM), jnp.float32),
            jax.ShapeDtypeStruct((3, b, Z_DIM), jnp.float32),
        ),
    )(xc, yc, xt, eps_z, ey, packed_w)

    y = out_y[0].reshape(b, n_tgt, Y_DIM)
    y_mu = out_y[1].reshape(b, n_tgt, Y_DIM)
    y_std = out_y[2].reshape(b, n_tgt, Y_DIM)
    z, z_mu, z_std = out_z[0], out_z[1], out_z[2]
    return y, y_mu, y_std, z, z_mu, z_std


neural_process_forward_jit = jax.jit(neural_process_forward)


# -------------------------- deterministic init --------------------------------
def _init_linear(key, fan_in, fan_out):
    """PyTorch-style uniform(-1/sqrt(fan_in), 1/sqrt(fan_in)) init."""
    kw, kb = jax.random.split(key)
    bound = 1.0 / np.sqrt(fan_in)
    w = jax.random.uniform(kw, (fan_in, fan_out), jnp.float32, -bound, bound)
    b = jax.random.uniform(kb, (1, fan_out), jnp.float32, -bound, bound)
    return w, b


def make_params(key):
    keys = iter(jax.random.split(key, 32))
    p = []

    # LatentEncoder: proj_in (x+y -> h), mlp (h->h, h->h), proj_z_mu/w (h -> z)
    w_in, b_in = _init_linear(next(keys), X_DIM + Y_DIM, H_DIM)
    p += [w_in[:X_DIM], w_in[X_DIM:], b_in]
    w1, b1 = _init_linear(next(keys), H_DIM, H_DIM)
    w2, b2 = _init_linear(next(keys), H_DIM, H_DIM)
    p += [w1, b1, w2, b2]
    wzmu, bzmu = _init_linear(next(keys), H_DIM, Z_DIM)
    wzw, bzw = _init_linear(next(keys), H_DIM, Z_DIM)
    p += [wzmu, bzmu, wzw, bzw]

    # DeterministicEncoder: proj_in (x+y -> h), mlp, proj_out (h -> r)
    w_in, b_in = _init_linear(next(keys), X_DIM + Y_DIM, H_DIM)
    p += [w_in[:X_DIM], w_in[X_DIM:], b_in]
    w1, b1 = _init_linear(next(keys), H_DIM, H_DIM)
    w2, b2 = _init_linear(next(keys), H_DIM, H_DIM)
    p += [w1, b1, w2, b2]
    wout, bout = _init_linear(next(keys), H_DIM, R_DIM)
    p += [wout, bout]

    # Decoder: proj_in (x+r+z -> h), mlp, proj_y_mu/w (h -> y)
    w_in, b_in = _init_linear(next(keys), X_DIM + R_DIM + Z_DIM, H_DIM)
    p += [w_in[:X_DIM], w_in[X_DIM:X_DIM + R_DIM], w_in[X_DIM + R_DIM:], b_in]
    w1, b1 = _init_linear(next(keys), H_DIM, H_DIM)
    w2, b2 = _init_linear(next(keys), H_DIM, H_DIM)
    p += [w1, b1, w2, b2]
    wmu, bmu = _init_linear(next(keys), H_DIM, Y_DIM)
    ww, bw = _init_linear(next(keys), H_DIM, Y_DIM)
    p += [wmu, bmu, ww, bw]
    return p


# ---------------------------- pure-JAX reference -------------------------------
def reference_forward(xc, yc, xt, eps_z, eps_y, p):
    (le_wx, le_wy, le_bin, le_w1, le_b1, le_w2, le_b2,
     le_wzmu, le_bzmu, le_wzw, le_bzw,
     de_wx, de_wy, de_bin, de_w1, de_b1, de_w2, de_b2, de_wout, de_bout,
     dc_wx, dc_wr, dc_wz, dc_bin, dc_w1, dc_b1, dc_w2, dc_b2,
     dc_wmu, dc_bmu, dc_ww, dc_bw) = p

    def mm(a, b):
        # full-f32 reference matmul (matches the Pallas kernel's MXU f32 path)
        return jnp.dot(a, b, precision=lax.Precision.HIGHEST)

    # latent encoder
    s = mm(jnp.concatenate([xc, yc], -1), jnp.concatenate([le_wx, le_wy], 0)) + le_bin
    s = mm(jnp.maximum(mm(s, le_w1) + le_b1, 0.0), le_w2) + le_b2
    s = jnp.mean(s, axis=1)
    z_mu, z_w = mm(s, le_wzmu) + le_bzmu, mm(s, le_wzw) + le_bzw
    z_std = 0.1 + 0.9 * _sigmoid(z_w)
    z = z_mu + z_std * eps_z

    # deterministic encoder (non-attentive)
    h = mm(jnp.concatenate([xc, yc], -1), jnp.concatenate([de_wx, de_wy], 0)) + de_bin
    h = mm(jnp.maximum(mm(h, de_w1) + de_b1, 0.0), de_w2) + de_b2
    r = jnp.mean(mm(h, de_wout) + de_bout, axis=1)              # (B, R)
    r_rep = jnp.broadcast_to(r[:, None, :], (xt.shape[0], xt.shape[1], R_DIM))
    z_rep = jnp.broadcast_to(z[:, None, :], (xt.shape[0], xt.shape[1], Z_DIM))

    # decoder
    hd = (mm(jnp.concatenate([xt, r_rep, z_rep], -1),
             jnp.concatenate([dc_wx, dc_wr, dc_wz], 0)) + dc_bin)
    hd = mm(jnp.maximum(mm(hd, dc_w1) + dc_b1, 0.0), dc_w2) + dc_b2
    y_mu, y_w = mm(hd, dc_wmu) + dc_bmu, mm(hd, dc_ww) + dc_bw
    y_std = 0.1 + 0.9 * _softplus(y_w)
    y = y_mu + y_std * eps_y
    return y, y_mu, y_std, z, z_mu, z_std


# --------------------------------- main ----------------------------------------
if __name__ == "__main__":
    key = jax.random.PRNGKey(0)
    k_param, k_xc, k_yc, k_xt, k_ez, k_ey = jax.random.split(key, 6)

    params = make_params(k_param)
    packed_w = pack_params(params)     # one-time host-side weight packing

    x_context = jax.random.normal(k_xc, (BATCH, N_CTX, X_DIM), jnp.float32)
    y_context = jax.random.normal(k_yc, (BATCH, N_CTX, Y_DIM), jnp.float32)
    x_target = jax.random.normal(k_xt, (BATCH, N_TGT, X_DIM), jnp.float32)
    eps_z = jax.random.normal(k_ez, (BATCH, Z_DIM), jnp.float32)
    eps_y = jax.random.normal(k_ey, (BATCH, N_TGT, Y_DIM), jnp.float32)

    outs = neural_process_forward_jit(x_context, y_context, x_target,
                                      eps_z, eps_y, packed_w)
    outs = jax.block_until_ready(outs)

    refs = reference_forward(x_context, y_context, x_target, eps_z, eps_y, params)
    for o, r in zip(outs, refs):
        np.testing.assert_allclose(np.asarray(o), np.asarray(r),
                                   rtol=1e-4, atol=1e-4)

    print("KERNEL_OK")
</pallas_src>

<mosaic_0001>
module attributes {stable_mosaic.version = 11 : i64} {
  func.func @_np_forward_kernel(%arg0: memref<32x8xf32, #tpu.memory_space<vmem>>, %arg1: memref<32x8xf32, #tpu.memory_space<vmem>>, %arg2: memref<32x8xf32, #tpu.memory_space<vmem>>, %arg3: memref<2x32xf32, #tpu.memory_space<vmem>>, %arg4: memref<32x8xf32, #tpu.memory_space<vmem>>, %arg5: memref<440x128xf32, #tpu.memory_space<vmem>>, %arg6: memref<3x32x8xf32, #tpu.memory_space<vmem>>, %arg7: memref<3x2x32xf32, #tpu.memory_space<vmem>>) attributes {dimension_semantics = [], scalar_prefetch = 0 : i64, scratch_operands = 0 : i64, tpu.core_type = #tpu.core_type<tc>} {
    %c0 = arith.constant 0 : index
    %c0_0 = arith.constant 0 : index
    %0 = vector.load %arg0[%c0, %c0_0] : memref<32x8xf32, #tpu.memory_space<vmem>>, vector<32x8xf32>
    %c0_1 = arith.constant 0 : index
    %c0_2 = arith.constant 0 : index
    %1 = vector.load %arg1[%c0_1, %c0_2] : memref<32x8xf32, #tpu.memory_space<vmem>>, vector<32x8xf32>
    %c0_3 = arith.constant 0 : index
    %c0_4 = arith.constant 0 : index
    %2 = vector.load %arg2[%c0_3, %c0_4] : memref<32x8xf32, #tpu.memory_space<vmem>>, vector<32x8xf32>
    %c0_5 = arith.constant 0 : index
    %c0_6 = arith.constant 0 : index
    %3 = vector.load %arg3[%c0_5, %c0_6] : memref<2x32xf32, #tpu.memory_space<vmem>>, vector<2x32xf32>
    %c0_7 = arith.constant 0 : index
    %c0_8 = arith.constant 0 : index
    %4 = vector.load %arg4[%c0_7, %c0_8] : memref<32x8xf32, #tpu.memory_space<vmem>>, vector<32x8xf32>
    %c0_9 = arith.constant 0 : index
    %c0_10 = arith.constant 0 : index
    %5 = vector.load %arg5[%c0_9, %c0_10] : memref<440x128xf32, #tpu.memory_space<vmem>>, vector<16x64xf32>
    %6 = vector.extract_strided_slice %5 {offsets = [0, 0], sizes = [8, 64], strides = [1, 1]} : vector<16x64xf32> to vector<8x64xf32>
    %cst = arith.constant dense<0.000000e+00> : vector<32x64xf32>
    %7 = tpu.matmul %0, %6, %cst {dimension_numbers = #tpu.dot_dimension_numbers<[1], [0], [0], [1], [0, 0, 1, 1], [], []>} : vector<32x8xf32>, vector<8x64xf32>, vector<32x64xf32> -> vector<32x64xf32>
    %8 = vector.extract_strided_slice %5 {offsets = [8, 0], sizes = [8, 64], strides = [1, 1]} : vector<16x64xf32> to vector<8x64xf32>
    %cst_11 = arith.constant dense<0.000000e+00> : vector<32x64xf32>
    %9 = tpu.matmul %1, %8, %cst_11 {dimension_numbers = #tpu.dot_dimension_numbers<[1], [0], [0], [1], [0, 0, 1, 1], [], []>} : vector<32x8xf32>, vector<8x64xf32>, vector<32x64xf32> -> vector<32x64xf32>
    %10 = arith.addf %7, %9 : vector<32x64xf32>
    %c16 = arith.constant 16 : index
    %c0_12 = arith.constant 0 : index
    %11 = vector.load %arg5[%c16, %c0_12] : memref<440x128xf32, #tpu.memory_space<vmem>>, vector<1x64xf32>
    %12 = vector.broadcast %11 : vector<1x64xf32> to vector<32x64xf32>
    %13 = arith.addf %10, %12 : vector<32x64xf32>
    %c24 = arith.constant 24 : index
    %c0_13 = arith.constant 0 : index
    %14 = vector.load %arg5[%c24, %c0_13] : memref<440x128xf32, #tpu.memory_space<vmem>>, vector<64x64xf32>
    %cst_14 = arith.constant dense<0.000000e+00> : vector<32x64xf32>
    %15 = tpu.matmul %13, %14, %cst_14 {dimension_numbers = #tpu.dot_dimension_numbers<[1], [0], [0], [1], [0, 0, 1, 1], [], []>} : vector<32x64xf32>, vector<64x64xf32>, vector<32x64xf32> -> vector<32x64xf32>
    %c88 = arith.constant 88 : index
    %c0_15 = arith.constant 0 : index
    %16 = vector.load %arg5[%c88, %c0_15] : memref<440x128xf32, #tpu.memory_space<vmem>>, vector<1x64xf32>
    %17 = vector.broadcast %16 : vector<1x64xf32> to vector<32x64xf32>
    %18 = arith.addf %15, %17 : vector<32x64xf32>
    %cst_16 = arith.constant 0.000000e+00 : f32
    %19 = vector.broadcast %cst_16 : f32 to vector<32x64xf32>
    %20 = arith.maximumf %18, %19 : vector<32x64xf32>
    %c96 = arith.constant 96 : index
    %c0_17 = arith.constant 0 : index
    %21 = vector.load %arg5[%c96, %c0_17] : memref<440x128xf32, #tpu.memory_space<vmem>>, vector<64x64xf32>
    %cst_18 = arith.constant dense<0.000000e+00> : vector<32x64xf32>
    %22 = tpu.matmul %20, %21, %cst_18 {dimension_numbers = #tpu.dot_dimension_numbers<[1], [0], [0], [1], [0, 0, 1, 1], [], []>} : vector<32x64xf32>, vector<64x64xf32>, vector<32x64xf32> -> vector<32x64xf32>
    %c160 = arith.constant 160 : index
    %c0_19 = arith.constant 0 : index
    %23 = vector.load %arg5[%c160, %c0_19] : memref<440x128xf32, #tpu.memory_space<vmem>>, vector<1x64xf32>
    %24 = vector.broadcast %23 : vector<1x64xf32> to vector<32x64xf32>
    %25 = arith.addf %22, %24 : vector<32x64xf32>
    %26 = tpu.iota {dimensions = array<i32: 0>} : vector<2x32xi32>
    %27 = tpu.iota {dimensions = array<i32: 1>} : vector<2x32xi32>
    %c16_i32 = arith.constant 16 : i32
    %28 = vector.broadcast %c16_i32 : i32 to vector<2x32xi32>
    %29 = arith.muli %26, %28 : vector<2x32xi32>
    %30 = arith.cmpi sge, %27, %29 : vector<2x32xi32>
    %c1_i32 = arith.constant 1 : i32
    %31 = vector.broadcast %c1_i32 : i32 to vector<2x32xi32>
    %32 = arith.addi %26, %31 : vector<2x32xi32>
    %c16_i32_20 = arith.constant 16 : i32
    %33 = vector.broadcast %c16_i32_20 : i32 to vector<2x32xi32>
    %34 = arith.muli %32, %33 : vector<2x32xi32>
    %35 = arith.cmpi slt, %27, %34 : vector<2x32xi32>
    %36 = arith.andi %30, %35 : vector<2x32xi1>
    %37 = arith.extui %36 : vector<2x32xi1> to vector<2x32xi32>
    %38 = arith.sitofp %37 : vector<2x32xi32> to vector<2x32xf32>
    %cst_21 = arith.constant dense<0.000000e+00> : vector<2x64xf32>
    %39 = tpu.matmul %38, %25, %cst_21 {dimension_numbers = #tpu.dot_dimension_numbers<[1], [0], [0], [1], [0, 0, 1, 1], [], []>} : vector<2x32xf32>, vector<32x64xf32>, vector<2x64xf32> -> vector<2x64xf32>
    %cst_22 = arith.constant 6.250000e-02 : f32
    %40 = vector.broadcast %cst_22 : f32 to vector<2x64xf32>
    %41 = arith.mulf %39, %40 : vector<2x64xf32>
    %c168 = arith.constant 168 : index
    %c0_23 = arith.constant 0 : index
    %42 = vector.load %arg5[%c168, %c0_23] : memref<440x128xf32, #tpu.memory_space<vmem>>, vector<64x96xf32>
    %cst_24 = arith.constant dense<0.000000e+00> : vector<2x96xf32>
    %43 = tpu.matmul %41, %42, %cst_24 {dimension_numbers = #tpu.dot_dimension_numbers<[1], [0], [0], [1], [0, 0, 1, 1], [], []>} : vector<2x64xf32>, vector<64x96xf32>, vector<2x96xf32> -> vector<2x96xf32>
    %c232 = arith.constant 232 : index
    %c0_25 = arith.constant 0 : index
    %44 = vector.load %arg5[%c232, %c0_25] : memref<440x128xf32, #tpu.memory_space<vmem>>, vector<1x96xf32>
    %45 = vector.broadcast %44 : vector<1x96xf32> to vector<2x96xf32>
    %46 = arith.addf %43, %45 : vector<2x96xf32>
    %47 = vector.extract_strided_slice %46 {offsets = [0, 0], sizes = [2, 32], strides = [1, 1]} : vector<2x96xf32> to vector<2x32xf32>
    %48 = vector.extract_strided_slice %46 {offsets = [0, 32], sizes = [2, 32], strides = [1, 1]} : vector<2x96xf32> to vector<2x32xf32>
    %49 = vector.extract_strided_slice %46 {offsets = [0, 64], sizes = [2, 32], strides = [1, 1]} : vector<2x96xf32> to vector<2x32xf32>
    %cst_26 = arith.constant 0.000000e+00 : f32
    %50 = vector.broadcast %cst_26 : f32 to vector<2x32xf32>
    %51 = arith.subf %50, %48 : vector<2x32xf32>
    %52 = math.exp %51 : vector<2x32xf32>
    %cst_27 = arith.constant 1.000000e+00 : f32
    %53 = vector.broadcast %cst_27 : f32 to vector<2x32xf32>
    %54 = arith.addf %53, %52 : vector<2x32xf32>
    %cst_28 = arith.constant 1.000000e+00 : f32
    %55 = vector.broadcast %cst_28 : f32 to vector<2x32xf32>
    %56 = arith.divf %55, %54 : vector<2x32xf32>
    %cst_29 = arith.constant 0.899999976 : f32
    %57 = vector.broadcast %cst_29 : f32 to vector<2x32xf32>
    %58 = arith.mulf %57, %56 : vector<2x32xf32>
    %cst_30 = arith.constant 1.000000e-01 : f32
    %59 = vector.broadcast %cst_30 : f32 to vector<2x32xf32>
    %60 = arith.addf %59, %58 : vector<2x32xf32>
    %61 = arith.mulf %60, %3 : vector<2x32xf32>
    %62 = arith.addf %47, %61 : vector<2x32xf32>
    %c248 = arith.constant 248 : index
    %c0_31 = arith.constant 0 : index
    %63 = vector.load %arg5[%c248, %c0_31] : memref<440x128xf32, #tpu.memory_space<vmem>>, vector<64x32xf32>
    %64 = vector.extract_strided_slice %63 {offsets = [0, 0], sizes = [32, 32], strides = [1, 1]} : vector<64x32xf32> to vector<32x32xf32>
    %cst_32 = arith.constant dense<0.000000e+00> : vector<2x32xf32>
    %65 = tpu.matmul %49, %64, %cst_32 {dimension_numbers = #tpu.dot_dimension_numbers<[1], [0], [0], [1], [0, 0, 1, 1], [], []>} : vector<2x32xf32>, vector<32x32xf32>, vector<2x32xf32> -> vector<2x32xf32>
    %66 = vector.extract_strided_slice %63 {offsets = [32, 0], sizes = [32, 32], strides = [1, 1]} : vector<64x32xf32> to vector<32x32xf32>
    %cst_33 = arith.constant dense<0.000000e+00> : vector<2x32xf32>
    %67 = tpu.matmul %62, %66, %cst_33 {dimension_numbers = #tpu.dot_dimension_numbers<[1], [0], [0], [1], [0, 0, 1, 1], [], []>} : vector<2x32xf32>, vector<32x32xf32>, vector<2x32xf32> -> vector<2x32xf32>
    %68 = arith.addf %65, %67 : vector<2x32xf32>
    %c312 = arith.constant 312 : index
    %c0_34 = arith.constant 0 : index
    %69 = vector.load %arg5[%c312, %c0_34] : memref<440x128xf32, #tpu.memory_space<vmem>>, vector<1x32xf32>
    %70 = vector.broadcast %69 : vector<1x32xf32> to vector<2x32xf32>
    %71 = arith.addf %68, %70 : vector<2x32xf32>
    %72 = tpu.iota {dimensions = array<i32: 0>} : vector<32x2xi32>
    %73 = tpu.iota {dimensions = array<i32: 1>} : vector<32x2xi32>
    %c16_i32_35 = arith.constant 16 : i32
    %74 = vector.broadcast %c16_i32_35 : i32 to vector<32x2xi32>
    %75 = arith.muli %73, %74 : vector<32x2xi32>
    %76 = arith.cmpi sge, %72, %75 : vector<32x2xi32>
    %c1_i32_36 = arith.constant 1 : i32
    %77 = vector.broadcast %c1_i32_36 : i32 to vector<32x2xi32>
    %78 = arith.addi %73, %77 : vector<32x2xi32>
    %c16_i32_37 = arith.constant 16 : i32
    %79 = vector.broadcast %c16_i32_37 : i32 to vector<32x2xi32>
    %80 = arith.muli %78, %79 : vector<32x2xi32>
    %81 = arith.cmpi slt, %72, %80 : vector<32x2xi32>
    %82 = arith.andi %76, %81 : vector<32x2xi1>
    %83 = arith.extui %82 : vector<32x2xi1> to vector<32x2xi32>
    %84 = arith.sitofp %83 : vector<32x2xi32> to vector<32x2xf32>
    %c240 = arith.constant 240 : index
    %c0_38 = arith.constant 0 : index
    %85 = vector.load %arg5[%c240, %c0_38] : memref<440x128xf32, #tpu.memory_space<vmem>>, vector<8x32xf32>
    %cst_39 = arith.constant dense<0.000000e+00> : vector<32x32xf32>
    %86 = tpu.matmul %2, %85, %cst_39 {dimension_numbers = #tpu.dot_dimension_numbers<[1], [0], [0], [1], [0, 0, 1, 1], [], []>} : vector<32x8xf32>, vector<8x32xf32>, vector<32x32xf32> -> vector<32x32xf32>
    %cst_40 = arith.constant dense<0.000000e+00> : vector<32x32xf32>
    %87 = tpu.matmul %84, %71, %cst_40 {dimension_numbers = #tpu.dot_dimension_numbers<[1], [0], [0], [1], [0, 0, 1, 1], [], []>} : vector<32x2xf32>, vector<2x32xf32>, vector<32x32xf32> -> vector<32x32xf32>
    %88 = arith.addf %86, %87 : vector<32x32xf32>
    %c320 = arith.constant 320 : index
    %c0_41 = arith.constant 0 : index
    %89 = vector.load %arg5[%c320, %c0_41] : memref<440x128xf32, #tpu.memory_space<vmem>>, vector<32x32xf32>
    %cst_42 = arith.constant dense<0.000000e+00> : vector<32x32xf32>
    %90 = tpu.matmul %88, %89, %cst_42 {dimension_numbers = #tpu.dot_dimension_numbers<[1], [0], [0], [1], [0, 0, 1, 1], [], []>} : vector<32x32xf32>, vector<32x32xf32>, vector<32x32xf32> -> vector<32x32xf32>
    %c352 = arith.constant 352 : index
    %c0_43 = arith.constant 0 : index
    %91 = vector.load %arg5[%c352, %c0_43] : memref<440x128xf32, #tpu.memory_space<vmem>>, vector<1x32xf32>
    %92 = vector.broadcast %91 : vector<1x32xf32> to vector<32x32xf32>
    %93 = arith.addf %90, %92 : vector<32x32xf32>
    %cst_44 = arith.constant 0.000000e+00 : f32
    %94 = vector.broadcast %cst_44 : f32 to vector<32x32xf32>
    %95 = arith.maximumf %93, %94 : vector<32x32xf32>
    %c360 = arith.constant 360 : index
    %c0_45 = arith.constant 0 : index
    %96 = vector.load %arg5[%c360, %c0_45] : memref<440x128xf32, #tpu.memory_space<vmem>>, vector<32x32xf32>
    %cst_46 = arith.constant dense<0.000000e+00> : vector<32x32xf32>
    %97 = tpu.matmul %95, %96, %cst_46 {dimension_numbers = #tpu.dot_dimension_numbers<[1], [0], [0], [1], [0, 0, 1, 1], [], []>} : vector<32x32xf32>, vector<32x32xf32>, vector<32x32xf32> -> vector<32x32xf32>
    %c392 = arith.constant 392 : index
    %c0_47 = arith.constant 0 : index
    %98 = vector.load %arg5[%c392, %c0_47] : memref<440x128xf32, #tpu.memory_space<vmem>>, vector<1x32xf32>
    %99 = vector.broadcast %98 : vector<1x32xf32> to vector<32x32xf32>
    %100 = arith.addf %97, %99 : vector<32x32xf32>
    %c400 = arith.constant 400 : index
    %c0_48 = arith.constant 0 : index
    %101 = vector.load %arg5[%c400, %c0_48] : memref<440x128xf32, #tpu.memory_space<vmem>>, vector<32x16xf32>
    %cst_49 = arith.constant dense<0.000000e+00> : vector<32x16xf32>
    %102 = tpu.matmul %100, %101, %cst_49 {dimension_numbers = #tpu.dot_dimension_numbers<[1], [0], [0], [1], [0, 0, 1, 1], [], []>} : vector<32x32xf32>, vector<32x16xf32>, vector<32x16xf32> -> vector<32x16xf32>
    %c432 = arith.constant 432 : index
    %c0_50 = arith.constant 0 : index
    %103 = vector.load %arg5[%c432, %c0_50] : memref<440x128xf32, #tpu.memory_space<vmem>>, vector<1x16xf32>
    %104 = vector.broadcast %103 : vector<1x16xf32> to vector<32x16xf32>
    %105 = arith.addf %102, %104 : vector<32x16xf32>
    %106 = vector.extract_strided_slice %105 {offsets = [0, 0], sizes = [32, 8], strides = [1, 1]} : vector<32x16xf32> to vector<32x8xf32>
    %107 = vector.extract_strided_slice %105 {offsets = [0, 8], sizes = [32, 8], strides = [1, 1]} : vector<32x16xf32> to vector<32x8xf32>
    %cst_51 = arith.constant 0.000000e+00 : f32
    %108 = vector.broadcast %cst_51 : f32 to vector<32x8xf32>
    %109 = arith.maximumf %107, %108 : vector<32x8xf32>
    %110 = math.absf %107 : vector<32x8xf32>
    %cst_52 = arith.constant 0.000000e+00 : f32
    %111 = vector.broadcast %cst_52 : f32 to vector<32x8xf32>
    %112 = arith.subf %111, %110 : vector<32x8xf32>
    %113 = math.exp %112 : vector<32x8xf32>
    %cst_53 = arith.constant 1.000000e+00 : f32
    %114 = vector.broadcast %cst_53 : f32 to vector<32x8xf32>
    %115 = arith.addf %114, %113 : vector<32x8xf32>
    %116 = math.log %115 : vector<32x8xf32>
    %117 = arith.addf %109, %116 : vector<32x8xf32>
    %cst_54 = arith.constant 0.899999976 : f32
    %118 = vector.broadcast %cst_54 : f32 to vector<32x8xf32>
    %119 = arith.mulf %118, %117 : vector<32x8xf32>
    %cst_55 = arith.constant 1.000000e-01 : f32
    %120 = vector.broadcast %cst_55 : f32 to vector<32x8xf32>
    %121 = arith.addf %120, %119 : vector<32x8xf32>
    %122 = arith.mulf %121, %4 : vector<32x8xf32>
    %123 = arith.addf %106, %122 : vector<32x8xf32>
    %c0_56 = arith.constant 0 : index
    %c0_57 = arith.constant 0 : index
    %c0_58 = arith.constant 0 : index
    %124 = vector.load %arg6[%c0_56, %c0_57, %c0_58] : memref<3x32x8xf32, #tpu.memory_space<vmem>>, vector<1x32x8xf32>
    %125 = vector.shape_cast %124 : vector<1x32x8xf32> to vector<32x8xf32>
    %126 = vector.shape_cast %123 : vector<32x8xf32> to vector<1x32x8xf32>
    tpu.vector_store %arg6[%c0_56, %c0_57, %c0_58], %126 {strides = array<i32>} : memref<3x32x8xf32, #tpu.memory_space<vmem>>, vector<1x32x8xf32>,
    %c1 = arith.constant 1 : index
    %c0_59 = arith.constant 0 : index
    %c0_60 = arith.constant 0 : index
    %127 = vector.load %arg6[%c1, %c0_59, %c0_60] : memref<3x32x8xf32, #tpu.memory_space<vmem>>, vector<1x32x8xf32>
    %128 = vector.shape_cast %127 : vector<1x32x8xf32> to vector<32x8xf32>
    %129 = vector.shape_cast %106 : vector<32x8xf32> to vector<1x32x8xf32>
    tpu.vector_store %arg6[%c1, %c0_59, %c0_60], %129 {strides = array<i32>} : memref<3x32x8xf32, #tpu.memory_space<vmem>>, vector<1x32x8xf32>,
    %c2 = arith.constant 2 : index
    %c0_61 = arith.constant 0 : index
    %c0_62 = arith.constant 0 : index
    %130 = vector.load %arg6[%c2, %c0_61, %c0_62] : memref<3x32x8xf32, #tpu.memory_space<vmem>>, vector<1x32x8xf32>
    %131 = vector.shape_cast %130 : vector<1x32x8xf32> to vector<32x8xf32>
    %132 = vector.shape_cast %121 : vector<32x8xf32> to vector<1x32x8xf32>
    tpu.vector_store %arg6[%c2, %c0_61, %c0_62], %132 {strides = array<i32>} : memref<3x32x8xf32, #tpu.memory_space<vmem>>, vector<1x32x8xf32>,
    %c0_63 = arith.constant 0 : index
    %c0_64 = arith.constant 0 : index
    %c0_65 = arith.constant 0 : index
    %133 = vector.load %arg7[%c0_63, %c0_64, %c0_65] : memref<3x2x32xf32, #tpu.memory_space<vmem>>, vector<1x2x32xf32>
    %134 = vector.shape_cast %133 : vector<1x2x32xf32> to vector<2x32xf32>
    %135 = vector.shape_cast %62 : vector<2x32xf32> to vector<1x2x32xf32>
    tpu.vector_store %arg7[%c0_63, %c0_64, %c0_65], %135 {strides = array<i32>} : memref<3x2x32xf32, #tpu.memory_space<vmem>>, vector<1x2x32xf32>,
    %c1_66 = arith.constant 1 : index
    %c0_67 = arith.constant 0 : index
    %c0_68 = arith.constant 0 : index
    %136 = vector.load %arg7[%c1_66, %c0_67, %c0_68] : memref<3x2x32xf32, #tpu.memory_space<vmem>>, vector<1x2x32xf32>
    %137 = vector.shape_cast %136 : vector<1x2x32xf32> to vector<2x32xf32>
    %138 = vector.shape_cast %47 : vector<2x32xf32> to vector<1x2x32xf32>
    tpu.vector_store %arg7[%c1_66, %c0_67, %c0_68], %138 {strides = array<i32>} : memref<3x2x32xf32, #tpu.memory_space<vmem>>, vector<1x2x32xf32>,
    %c2_69 = arith.constant 2 : index
    %c0_70 = arith.constant 0 : index
    %c0_71 = arith.constant 0 : index
    %139 = vector.load %arg7[%c2_69, %c0_70, %c0_71] : memref<3x2x32xf32, #tpu.memory_space<vmem>>, vector<1x2x32xf32>
    %140 = vector.shape_cast %139 : vector<1x2x32xf32> to vector<2x32xf32>
    %141 = vector.shape_cast %60 : vector<2x32xf32> to vector<1x2x32xf32>
    tpu.vector_store %arg7[%c2_69, %c0_70, %c0_71], %141 {strides = array<i32>} : memref<3x2x32xf32, #tpu.memory_space<vmem>>, vector<1x2x32xf32>,
    return
  }
}

</mosaic_0001>

<llo_original>
// kernel: neural_process_forward.1
$region0: #{neural_process_forward.1}
  #allocation0 [shape = 'u32[]', space=smem, size = 0x4, offset = 0x4, fixed_abs, tag = 'smem constant byte address 0x4 - core index']
  #allocation1 [shape = 'u32[72,128]{1,0:T(1,128)}', space=vmem, size = 0x9000, scoped, tag = 'internal scratch']
  %s0 = inlined_call_operand.vmem [shape: f32[32,8], index: 0, kind: input, shape index: {}]
  %s1 = inlined_call_operand.vmem [shape: f32[32,8], index: 1, kind: input, shape index: {}]
  %s2 = inlined_call_operand.vmem [shape: f32[32,8], index: 2, kind: input, shape index: {}]
  %s3 = inlined_call_operand.vmem [shape: f32[2,32], index: 3, kind: input, shape index: {}]
  %s4 = inlined_call_operand.vmem [shape: f32[32,8], index: 4, kind: input, shape index: {}]
  %s5 = inlined_call_operand.hbm [shape: f32[440,128], index: 5, kind: input, shape index: {}]
  %s6 = inlined_call_operand.vmem [shape: f32[3,32,8], index: 6, kind: output, shape index: {0}]
  %s7 = inlined_call_operand.vmem [shape: f32[3,2,32], index: 7, kind: output, shape index: {1}]
  %8 = xla_tuple %s6, %s7
  %s9 = sld [smem:[#allocation0]]
  $region46: #{neural_process_forward.1} parent=0
    _
  %s11 = ssub.s32 1, %s9
  %s12 = scalar_select 0, %s11, %s9
  $region1: #{neural_process_forward.1} parent=0
    #allocation2 [shape = 'u8[225280]{0}', space=vmem, size = 0x37000, scoped, tag = 'input window, operand 5, single buffered']
    #allocation3 [shape = 's32[1]{0}', space=sflag, size = 0x4, scoped, tag = 'scoped memory for neural_process_forward.1']
    %13 = vsyncpa [#allocation3], 0
    // Predicated region
    $region2: #{neural_process_forward.1} parent=1 // pred_check
      _
    $region3: #{neural_process_forward.1} parent=1 // pred_check_branch
      %15 = sbr.rel (0) target = $region5
    $region4: #{neural_process_forward.1} parent=1 // pred_region
      _
    $region5: #{neural_process_forward.1} parent=1 // pred_fallthru
      _
    // Predicated region
    $region6: #{neural_process_forward.1} parent=1 // pred_check
      _
    $region7: #{neural_process_forward.1} parent=1 // pred_check_branch
      %17 = sbr.rel (0) target = $region9
    $region8: #{neural_process_forward.1} parent=1 // pred_region
      _
    $region9: #{neural_process_forward.1} parent=1 // pred_fallthru
      _
    // Predicated region
    $region10: #{neural_process_forward.1} parent=1 // pred_check
      _
    $region11: #{neural_process_forward.1} parent=1 // pred_check_branch
      %19 = sbr.rel (0) target = $region13
    $region12: #{neural_process_forward.1} parent=1 // pred_region
      _
    $region13: #{neural_process_forward.1} parent=1 // pred_fallthru
      _
    // Predicated region
    $region14: #{neural_process_forward.1} parent=1 // pred_check
      _
    $region15: #{neural_process_forward.1} parent=1 // pred_check_branch
      %21 = sbr.rel (0) target = $region17
    $region16: #{neural_process_forward.1} parent=1 // pred_region
      _
    $region17: #{neural_process_forward.1} parent=1 // pred_fallthru
      _
    // Predicated region
    $region18: #{neural_process_forward.1} parent=1 // pred_check
      _
    $region19: #{neural_process_forward.1} parent=1 // pred_check_branch
      %23 = sbr.rel (0) target = $region21
    $region20: #{neural_process_forward.1} parent=1 // pred_region
      _
    $region21: #{neural_process_forward.1} parent=1 // pred_fallthru
      _
    // Predicated region
    $region22: #{neural_process_forward.1} parent=1 // pred_check
      _
    $region23: #{neural_process_forward.1} parent=1 // pred_check_branch
      %25 = sbr.rel (0) target = $region25
    $region24: #{neural_process_forward.1} parent=1 // pred_region
      %27 = vsyncadd [#allocation3], 0
      %s28 = sshll.u32 %s5, 4
      %s29 = int_to_ptr.hbm [resolvable:$true] %s28
      %s30 = sshll.u32 [#allocation2], 4
      %s31 = int_to_ptr.vmem [resolvable:$true] %s30
      %36 = dma.hbm_to_vmem [thread:$0]  %s29, 7040, %s31, [#allocation3], 128, 128, 8
    $region25: #{neural_process_forward.1} parent=1 // pred_fallthru
      _
    // Predicated region
    $region26: #{neural_process_forward.1} parent=1 // pred_check
      _
    $region27: #{neural_process_forward.1} parent=1 // pred_check_branch
      %38 = sbr.rel (0) target = $region29
    $region28: #{neural_process_forward.1} parent=1 // pred_region
      %40 = dma.done [#allocation3], 7040
    $region29: #{neural_process_forward.1} parent=1 // pred_fallthru
      _
    %v41 = vld [vmem:[%s0] sm:$0xff]
    %v42 = vld [vmem:[%s0 + $0x8] sm:$0xff]
    %v43 = vld [vmem:[%s0 + $0x10] sm:$0xff]
    %v44 = vld [vmem:[%s0 + $0x18] sm:$0xff]
    %v45 = vld [vmem:[%s1] sm:$0xff]
    %v46 = vld [vmem:[%s1 + $0x8] sm:$0xff]
    %v47 = vld [vmem:[%s1 + $0x10] sm:$0xff]
    %v48 = vld [vmem:[%s1 + $0x18] sm:$0xff]
    %v49 = vld [vmem:[%s2] sm:$0xff]
    %v50 = vld [vmem:[%s2 + $0x8] sm:$0xff]
    %v51 = vld [vmem:[%s2 + $0x10] sm:$0xff]
    %v52 = vld [vmem:[%s2 + $0x18] sm:$0xff]
    %v53 = vld [vmem:[%s3] sm:$0x3]
    %v54 = vld [vmem:[%s4] sm:$0xff]
    %v55 = vld [vmem:[%s4 + $0x8] sm:$0xff]
    %v56 = vld [vmem:[%s4 + $0x10] sm:$0xff]
    %v57 = vld [vmem:[%s4 + $0x18] sm:$0xff]
    %v58 = vld [vmem:[#allocation2] sm:$0xff]
    %v59 = vld [vmem:[#allocation2 + $0x8] sm:$0xff]
    %vm60 = vcmask 64512
    %v62 = vsel %vm60, %v45, 0
    %v65 = vsel %vm60, %v46, 0
    %v68 = vsel %vm60, %v47, 0
    %v71 = vsel %vm60, %v48, 0
    %73 = vmatpush.msra.mxu0 0.0
    %74 = vmatpush.msra.mxu0 0.0
    %75 = vmatpush.msra.mxu0 0.0
    %76 = vmatpush.msra.mxu0 0.0
    %77 = vmatpush.msra.mxu0 0.0
    %78 = vmatpush.msra.mxu0 0.0
    %79 = vmatpush.msra.mxu0 0.0
    %80 = vmatpush.msra.mxu0 0.0
    %81 = vmatpush.msra.mxu0 0.0
    %82 = vmatpush.msra.mxu0 0.0
    %83 = vmatpush.msra.mxu0 0.0
    %84 = vmatpush.msra.mxu0 0.0
    %85 = vmatpush.msra.mxu0 0.0
    %86 = vmatpush.msra.mxu0 0.0
    %87 = vmatpush.msra.mxu0 0.0
    %88 = vmatpush.msra.mxu0 %v59
    %89 = vmatmul.f32.gmra.mxu0 %v62
    %v90 = vpop.f32.mrf.mxu0
    %v91 = vadd.f32 0.0, %v90
    %92 = vmatmul.f32.gmra.mxu0 %v65
    %v93 = vpop.f32.mrf.mxu0
    %v94 = vadd.f32 0.0, %v93
    %95 = vmatmul.f32.gmra.mxu0 %v68
    %v96 = vpop.f32.mrf.mxu0
    %v97 = vadd.f32 0.0, %v96
    %98 = vmatmul.f32.gmra.mxu0 %v71
    %v99 = vpop.f32.mrf.mxu0
    %v100 = vadd.f32 0.0, %v99
    %101 = vdwg.mxu0
    %v103 = vsel %vm60, %v41, 0
    %v106 = vsel %vm60, %v42, 0
    %v109 = vsel %vm60, %v43, 0
    %v112 = vsel %vm60, %v44, 0
    %114 = vmatpush.msra.mxu0 0.0
    %115 = vmatpush.msra.mxu0 0.0
    %116 = vmatpush.msra.mxu0 0.0
    %117 = vmatpush.msra.mxu0 0.0
    %118 = vmatpush.msra.mxu0 0.0
    %119 = vmatpush.msra.mxu0 0.0
    %120 = vmatpush.msra.mxu0 0.0
    %121 = vmatpush.msra.mxu0 0.0
    %122 = vmatpush.msra.mxu0 0.0
    %123 = vmatpush.msra.mxu0 0.0
    %124 = vmatpush.msra.mxu0 0.0
    %125 = vmatpush.msra.mxu0 0.0
    %126 = vmatpush.msra.mxu0 0.0
    %127 = vmatpush.msra.mxu0 0.0
    %128 = vmatpush.msra.mxu0 0.0
    %129 = vmatpush.msra.mxu0 %v58
    %130 = vmatmul.f32.gmra.mxu0 %v103
    %v131 = vpop.f32.mrf.mxu0
    %v132 = vadd.f32 %v91, %v131
    %133 = vmatmul.f32.gmra.mxu0 %v106
    %v134 = vpop.f32.mrf.mxu0
    %v135 = vadd.f32 %v94, %v134
    %136 = vmatmul.f32.gmra.mxu0 %v109
    %v137 = vpop.f32.mrf.mxu0
    %v138 = vadd.f32 %v97, %v137
    %139 = vmatmul.f32.gmra.mxu0 %v112
    %v140 = vpop.f32.mrf.mxu0
    %v141 = vadd.f32 %v100, %v140
    %142 = vdwg.mxu0
    %v143 = vld [vmem:[#allocation2 + $0x10] sm:$0x1]
    %v144 = vperm.slane %v143, 0
    %v145 = vadd.f32 %v132, %v144
    %v146 = vadd.f32 %v135, %v144
    %v147 = vadd.f32 %v138, %v144
    %v148 = vadd.f32 %v141, %v144
    %v149 = vld [vmem:[#allocation2 + $0x18] sm:$0xff]
    %v150 = vld [vmem:[#allocation2 + $0x20] sm:$0xff]
    %v151 = vld [vmem:[#allocation2 + $0x28] sm:$0xff]
    %v152 = vld [vmem:[#allocation2 + $0x30] sm:$0xff]
    %v153 = vld [vmem:[#allocation2 + $0x38] sm:$0xff]
    %v154 = vld [vmem:[#allocation2 + $0x40] sm:$0xff]
    %v155 = vld [vmem:[#allocation2 + $0x48] sm:$0xff]
    %v156 = vld [vmem:[#allocation2 + $0x50] sm:$0xff]
    %v157 = vld [vmem:[#allocation2 + $0x58] sm:$0x1]
    %v158 = vperm.slane %v157, 0
    %vm159 = vcmask 523264
    %v161 = vsel %vm159, %v145, 0
    %v164 = vsel %vm159, %v146, 0
    %v167 = vsel %vm159, %v147, 0
    %v170 = vsel %vm159, %v148, 0
    %172 = vmatpush.msra.mxu0 0.0
    %173 = vmatpush.msra.mxu0 0.0
    %174 = vmatpush.msra.mxu0 0.0
    %175 = vmatpush.msra.mxu0 0.0
    %176 = vmatpush.msra.mxu0 0.0
    %177 = vmatpush.msra.mxu0 0.0
    %178 = vmatpush.msra.mxu0 0.0
    %179 = vmatpush.msra.mxu0 0.0
    %180 = vmatpush.msra.mxu0 %v156
    %181 = vmatpush.msra.mxu0 %v155
    %182 = vmatpush.msra.mxu0 %v154
    %183 = vmatpush.msra.mxu0 %v153
    %184 = vmatpush.msra.mxu0 %v152
    %185 = vmatpush.msra.mxu0 %v151
    %186 = vmatpush.msra.mxu0 %v150
    %187 = vmatpush.msra.mxu0 %v149
    %188 = vmatmul.f32.gmra.mxu0 %v161
    %v189 = vpop.f32.mrf.mxu0
    %v190 = vadd.f32 %v158, %v189
    %191 = vmatmul.f32.gmra.mxu0 %v164
    %v192 = vpop.f32.mrf.mxu0
    %v193 = vadd.f32 %v158, %v192
    %194 = vmatmul.f32.gmra.mxu0 %v167
    %v195 = vpop.f32.mrf.mxu0
    %v196 = vadd.f32 %v158, %v195
    %197 = vmatmul.f32.gmra.mxu0 %v170
    %v198 = vpop.f32.mrf.mxu0
    %v199 = vadd.f32 %v158, %v198
    %200 = vdwg.mxu0
    %v201 = vmax.f32 %v190, 0.0
    %v202 = vmax.f32 %v193, 0.0
    %v203 = vmax.f32 %v196, 0.0
    %v204 = vmax.f32 %v199, 0.0
    %v205 = vld [vmem:[#allocation2 + $0x60] sm:$0xff]
    %v206 = vld [vmem:[#allocation2 + $0x68] sm:$0xff]
    %v207 = vld [vmem:[#allocation2 + $0x70] sm:$0xff]
    %v208 = vld [vmem:[#allocation2 + $0x78] sm:$0xff]
    %v209 = vld [vmem:[#allocation2 + $0x80] sm:$0xff]
    %v210 = vld [vmem:[#allocation2 + $0x88] sm:$0xff]
    %v211 = vld [vmem:[#allocation2 + $0x90] sm:$0xff]
    %v212 = vld [vmem:[#allocation2 + $0x98] sm:$0xff]
    %v213 = vld [vmem:[#allocation2 + $0xa0] sm:$0x1]
    %v214 = vperm.slane %v213, 0
    %v216 = vsel %vm159, %v201, 0
    %v219 = vsel %vm159, %v202, 0
    %v222 = vsel %vm159, %v203, 0
    %v225 = vsel %vm159, %v204, 0
    %227 = vmatpush.msra.mxu0 0.0
    %228 = vmatpush.msra.mxu0 0.0
    %229 = vmatpush.msra.mxu0 0.0
    %230 = vmatpush.msra.mxu0 0.0
    %231 = vmatpush.msra.mxu0 0.0
    %232 = vmatpush.msra.mxu0 0.0
    %233 = vmatpush.msra.mxu0 0.0
    %234 = vmatpush.msra.mxu0 0.0
    %235 = vmatpush.msra.mxu0 %v212
    %236 = vmatpush.msra.mxu0 %v211
    %237 = vmatpush.msra.mxu0 %v210
    %238 = vmatpush.msra.mxu0 %v209
    %239 = vmatpush.msra.mxu0 %v208
    %240 = vmatpush.msra.mxu0 %v207
    %241 = vmatpush.msra.mxu0 %v206
    %242 = vmatpush.msra.mxu0 %v205
    %243 = vmatmul.f32.gmra.mxu0 %v216
    %v244 = vpop.f32.mrf.mxu0
    %v245 = vadd.f32 %v214, %v244
    %246 = vmatmul.f32.gmra.mxu0 %v219
    %v247 = vpop.f32.mrf.mxu0
    %v248 = vadd.f32 %v214, %v247
    %249 = vmatmul.f32.gmra.mxu0 %v222
    %v250 = vpop.f32.mrf.mxu0
    %v251 = vadd.f32 %v214, %v250
    %252 = vmatmul.f32.gmra.mxu0 %v225
    %v253 = vpop.f32.mrf.mxu0
    %v254 = vadd.f32 %v214, %v253
    %255 = vdwg.mxu0
    %v256 = vlaneseq
    %v257 = vshrl.u32 %v256, 7
    %v258 = vlaneseq
    %v259 = vand.u32 %v258, 127
    %v260 = vmul.u32 %v257, 16
    %vm261 = vcmp.ge.s32.totalorder %v259, %v260
    %v262 = vadd.s32 %v257, 1
    %v263 = vmul.u32 %v262, 16
    %vm264 = vcmp.lt.s32.totalorder %v259, %v263
    %vm265 = vmand %vm261, %vm264
    %v266 = vsel %vm265, 1, 0
    %v267 = vcvt.s32.f32 %v266
    %vm268 = vcmask 261120
    %v270 = vsel %vm268, %v267, 0
    %272 = vmatpush.msra.mxu0 0.0
    %273 = vmatpush.msra.mxu0 0.0
    %274 = vmatpush.msra.mxu0 0.0
    %275 = vmatpush.msra.mxu0 0.0
    %276 = vmatpush.msra.mxu0 0.0
    %277 = vmatpush.msra.mxu0 0.0
    %278 = vmatpush.msra.mxu0 0.0
    %279 = vmatpush.msra.mxu0 0.0
    %280 = vmatpush.msra.mxu0 0.0
    %281 = vmatpush.msra.mxu0 0.0
    %282 = vmatpush.msra.mxu0 0.0
    %283 = vmatpush.msra.mxu0 0.0
    %284 = vmatpush.msra.mxu0 %v254
    %285 = vmatpush.msra.mxu0 %v251
    %286 = vmatpush.msra.mxu0 %v248
    %287 = vmatpush.msra.mxu0 %v245
    %288 = vmatmul.f32.gmra.mxu0 %v270
    %v289 = vpop.f32.mrf.mxu0
    %v290 = vadd.f32 0.0, %v289
    %291 = vdwg.mxu0
    %v292 = vmul.f32 %v290, 0.0625
    %v293 = vld [vmem:[#allocation2 + $0xa8] sm:$0xff]
    %v294 = vld [vmem:[#allocation2 + $0xb0] sm:$0xff]
    %v295 = vld [vmem:[#allocation2 + $0xb8] sm:$0xff]
    %v296 = vld [vmem:[#allocation2 + $0xc0] sm:$0xff]
    %v297 = vld [vmem:[#allocation2 + $0xc8] sm:$0xff]
    %v298 = vld [vmem:[#allocation2 + $0xd0] sm:$0xff]
    %v299 = vld [vmem:[#allocation2 + $0xd8] sm:$0xff]
    %v300 = vld [vmem:[#allocation2 + $0xe0] sm:$0xff]
    %v301 = vld [vmem:[#allocation2 + $0xe8] sm:$0x1]
    %v302 = vperm.slane %v301, 0
    %v304 = vsel %vm159, %v292, 0
    %306 = vmatpush.msra.mxu0 0.0
    %307 = vmatpush.msra.mxu0 0.0
    %308 = vmatpush.msra.mxu0 0.0
    %309 = vmatpush.msra.mxu0 0.0
    %310 = vmatpush.msra.mxu0 0.0
    %311 = vmatpush.msra.mxu0 0.0
    %312 = vmatpush.msra.mxu0 0.0
    %313 = vmatpush.msra.mxu0 0.0
    %314 = vmatpush.msra.mxu0 %v300
    %315 = vmatpush.msra.mxu0 %v299
    %316 = vmatpush.msra.mxu0 %v298
    %317 = vmatpush.msra.mxu0 %v297
    %318 = vmatpush.msra.mxu0 %v296
    %319 = vmatpush.msra.mxu0 %v295
    %320 = vmatpush.msra.mxu0 %v294
    %321 = vmatpush.msra.mxu0 %v293
    %322 = vmatmul.f32.gmra.mxu0 %v304
    %v323 = vpop.f32.mrf.mxu0
    %v324 = vadd.f32 %v302, %v323
    %325 = vdwg.mxu0
    %v326 = vsub.f32 0.0, %v324
    %v327 = vmul.f32 %v326, 1.442695
    %v328 = vpow.pop %v327
    %v329 = vadd.f32 %v328, 1.0
    %v330 = vrcp.pop %v329
    %v331 = vmul.f32 %v329, %v330
    %v332 = vsub.f32 1.0, %v331
    %v333 = vmul.f32 %v330, %v332
    %v334 = vadd.f32 %v330, %v333
    %vm335 = vweird.f32 %v329
    %vm336 = vweird.f32 %v330
    %vm337 = vmor %vm335, %vm336
    %v338 = vsel %vm337, %v330, %v334
    %v339 = vand.u32 2147483647, %v329
    %vm340 = vcmp.eq.f32.partialorder %v339, 8.507059e+37
    %v341 = vand.u32 %v329, 2147483648
    %v342 = vor.u32 1.1754944e-38, %v341
    %v343 = vsel %vm340, %v342, %v338
    %v344 = vmul.f32 1.0, %v343
    %v345 = vmul.f32 %v344, 0.9
    %v346 = vadd.f32 %v345, 0.1
    %348 = vrot.lane.b32.xlu0 %v53, 32
    %v349 = vpop.permute.xlu0 %348
    %v351 = vmul.f32 %v346, %v349
    %353 = vrot.lane.b32.xlu0 %v351, 96
    %v354 = vpop.permute.xlu0 %353
    %v356 = vadd.f32 %v324, %v354
    %v357 = vld [vmem:[#allocation2 + $0xf8] sm:$0xff]
    %v358 = vld [vmem:[#allocation2 + $0x100] sm:$0xff]
    %v359 = vld [vmem:[#allocation2 + $0x108] sm:$0xff]
    %v360 = vld [vmem:[#allocation2 + $0x110] sm:$0xff]
    %v361 = vld [vmem:[#allocation2 + $0x118] sm:$0xff]
    %v362 = vld [vmem:[#allocation2 + $0x120] sm:$0xff]
    %v363 = vld [vmem:[#allocation2 + $0x128] sm:$0xff]
    %v364 = vld [vmem:[#allocation2 + $0x130] sm:$0xff]
    %v366 = vsel %vm268, %v356, 0
    %368 = vmatpush.msra.mxu0 0.0
    %369 = vmatpush.msra.mxu0 0.0
    %370 = vmatpush.msra.mxu0 0.0
    %371 = vmatpush.msra.mxu0 0.0
    %372 = vmatpush.msra.mxu0 0.0
    %373 = vmatpush.msra.mxu0 0.0
    %374 = vmatpush.msra.mxu0 0.0
    %375 = vmatpush.msra.mxu0 0.0
    %376 = vmatpush.msra.mxu0 0.0
    %377 = vmatpush.msra.mxu0 0.0
    %378 = vmatpush.msra.mxu0 0.0
    %379 = vmatpush.msra.mxu0 0.0
    %380 = vmatpush.msra.mxu0 %v364
    %381 = vmatpush.msra.mxu0 %v363
    %382 = vmatpush.msra.mxu0 %v362
    %383 = vmatpush.msra.mxu0 %v361
    %384 = vmatmul.f32.gmra.mxu0 %v366
    %v385 = vpop.f32.mrf.mxu0
    %v386 = vadd.f32 0.0, %v385
    %387 = vdwg.mxu0
    %389 = vrot.lane.b32.xlu0 %v324, 64
    %v390 = vpop.permute.xlu0 %389
    %v391 = vsel %vm268, %v390, 0
    %393 = vmatpush.msra.mxu0 0.0
    %394 = vmatpush.msra.mxu0 0.0
    %395 = vmatpush.msra.mxu0 0.0
    %396 = vmatpush.msra.mxu0 0.0
    %397 = vmatpush.msra.mxu0 0.0
    %398 = vmatpush.msra.mxu0 0.0
    %399 = vmatpush.msra.mxu0 0.0
    %400 = vmatpush.msra.mxu0 0.0
    %401 = vmatpush.msra.mxu0 0.0
    %402 = vmatpush.msra.mxu0 0.0
    %403 = vmatpush.msra.mxu0 0.0
    %404 = vmatpush.msra.mxu0 0.0
    %405 = vmatpush.msra.mxu0 %v360
    %406 = vmatpush.msra.mxu0 %v359
    %407 = vmatpush.msra.mxu0 %v358
    %408 = vmatpush.msra.mxu0 %v357
    %409 = vmatmul.f32.gmra.mxu0 %v391
    %v410 = vpop.f32.mrf.mxu0
    %v411 = vadd.f32 %v386, %v410
    %412 = vdwg.mxu0
    %v413 = vld [vmem:[#allocation2 + $0x138] sm:$0x1]
    %v414 = vperm.slane %v413, 0
    %v415 = vadd.f32 %v411, %v414
    %v416 = vadd.s32 %v257, 8
    %v417 = vadd.s32 %v257, 16
    %v418 = vadd.s32 %v257, 24
    %v419 = vmul.u32 %v259, 16
    %vm420 = vcmp.ge.s32.totalorder %v257, %v419
    %vm421 = vcmp.ge.s32.totalorder %v416, %v419
    %vm422 = vcmp.ge.s32.totalorder %v417, %v419
    %vm423 = vcmp.ge.s32.totalorder %v418, %v419
    %v424 = vadd.s32 %v259, 1
    %v425 = vmul.u32 %v424, 16
    %vm426 = vcmp.lt.s32.totalorder %v257, %v425
    %vm427 = vcmp.lt.s32.totalorder %v416, %v425
    %vm428 = vcmp.lt.s32.totalorder %v417, %v425
    %vm429 = vcmp.lt.s32.totalorder %v418, %v425
    %vm430 = vmand %vm420, %vm426
    %vm431 = vmand %vm421, %vm427
    %vm432 = vmand %vm422, %vm428
    %vm433 = vmand %vm423, %vm429
    %v434 = vsel %vm430, 1, 0
    %v435 = vsel %vm431, 1, 0
    %v436 = vsel %vm432, 1, 0
    %v437 = vsel %vm433, 1, 0
    %v438 = vcvt.s32.f32 %v434
    %v439 = vcvt.s32.f32 %v435
    %v440 = vcvt.s32.f32 %v436
    %v441 = vcvt.s32.f32 %v437
    %v442 = vld [vmem:[#allocation2 + $0xf0] sm:$0xff]
    %vm443 = vcmask 15360
    %v445 = vsel %vm443, %v438, 0
    %v448 = vsel %vm443, %v439, 0
    %v451 = vsel %vm443, %v440, 0
    %v454 = vsel %vm443, %v441, 0
    %vm456 = vcmask 1041408
    %v458 = vsel %vm456, %v415, 0
    %460 = vmatpush.msra.mxu0 0.0
    %461 = vmatpush.msra.mxu0 0.0
    %462 = vmatpush.msra.mxu0 0.0
    %463 = vmatpush.msra.mxu0 0.0
    %464 = vmatpush.msra.mxu0 0.0
    %465 = vmatpush.msra.mxu0 0.0
    %466 = vmatpush.msra.mxu0 0.0
    %467 = vmatpush.msra.mxu0 0.0
    %468 = vmatpush.msra.mxu0 0.0
    %469 = vmatpush.msra.mxu0 0.0
    %470 = vmatpush.msra.mxu0 0.0
    %471 = vmatpush.msra.mxu0 0.0
    %472 = vmatpush.msra.mxu0 0.0
    %473 = vmatpush.msra.mxu0 0.0
    %474 = vmatpush.msra.mxu0 0.0
    %475 = vmatpush.msra.mxu0 %v458
    %476 = vmatmul.f32.gmra.mxu0 %v445
    %v477 = vpop.f32.mrf.mxu0
    %v478 = vadd.f32 0.0, %v477
    %479 = vmatmul.f32.gmra.mxu0 %v448
    %v480 = vpop.f32.mrf.mxu0
    %v481 = vadd.f32 0.0, %v480
    %482 = vmatmul.f32.gmra.mxu0 %v451
    %v483 = vpop.f32.mrf.mxu0
    %v484 = vadd.f32 0.0, %v483
    %485 = vmatmul.f32.gmra.mxu0 %v454
    %v486 = vpop.f32.mrf.mxu0
    %v487 = vadd.f32 0.0, %v486
    %488 = vdwg.mxu0
    %v490 = vsel %vm60, %v49, 0
    %v493 = vsel %vm60, %v50, 0
    %v496 = vsel %vm60, %v51, 0
    %v499 = vsel %vm60, %v52, 0
    %501 = vmatpush.msra.mxu0 0.0
    %502 = vmatpush.msra.mxu0 0.0
    %503 = vmatpush.msra.mxu0 0.0
    %504 = vmatpush.msra.mxu0 0.0
    %505 = vmatpush.msra.mxu0 0.0
    %506 = vmatpush.msra.mxu0 0.0
    %507 = vmatpush.msra.mxu0 0.0
    %508 = vmatpush.msra.mxu0 0.0
    %509 = vmatpush.msra.mxu0 0.0
    %510 = vmatpush.msra.mxu0 0.0
    %511 = vmatpush.msra.mxu0 0.0
    %512 = vmatpush.msra.mxu0 0.0
    %513 = vmatpush.msra.mxu0 0.0
    %514 = vmatpush.msra.mxu0 0.0
    %515 = vmatpush.msra.mxu0 0.0
    %516 = vmatpush.msra.mxu0 %v442
    %517 = vmatmul.f32.gmra.mxu0 %v490
    %v518 = vpop.f32.mrf.mxu0
    %v519 = vadd.f32 %v478, %v518
    %520 = vmatmul.f32.gmra.mxu0 %v493
    %v521 = vpop.f32.mrf.mxu0
    %v522 = vadd.f32 %v481, %v521
    %523 = vmatmul.f32.gmra.mxu0 %v496
    %v524 = vpop.f32.mrf.mxu0
    %v525 = vadd.f32 %v484, %v524
    %526 = vmatmul.f32.gmra.mxu0 %v499
    %v527 = vpop.f32.mrf.mxu0
    %v528 = vadd.f32 %v487, %v527
    %529 = vdwg.mxu0
    %v530 = vld [vmem:[#allocation2 + $0x140] sm:$0xff]
    %v531 = vld [vmem:[#allocation2 + $0x148] sm:$0xff]
    %v532 = vld [vmem:[#allocation2 + $0x150] sm:$0xff]
    %v533 = vld [vmem:[#allocation2 + $0x158] sm:$0xff]
    %v534 = vld [vmem:[#allocation2 + $0x160] sm:$0x1]
    %v535 = vperm.slane %v534, 0
    %v537 = vsel %vm268, %v519, 0
    %v540 = vsel %vm268, %v522, 0
    %v543 = vsel %vm268, %v525, 0
    %v546 = vsel %vm268, %v528, 0
    %548 = vmatpush.msra.mxu0 0.0
    %549 = vmatpush.msra.mxu0 0.0
    %550 = vmatpush.msra.mxu0 0.0
    %551 = vmatpush.msra.mxu0 0.0
    %552 = vmatpush.msra.mxu0 0.0
    %553 = vmatpush.msra.mxu0 0.0
    %554 = vmatpush.msra.mxu0 0.0
    %555 = vmatpush.msra.mxu0 0.0
    %556 = vmatpush.msra.mxu0 0.0
    %557 = vmatpush.msra.mxu0 0.0
    %558 = vmatpush.msra.mxu0 0.0
    %559 = vmatpush.msra.mxu0 0.0
    %560 = vmatpush.msra.mxu0 %v533
    %561 = vmatpush.msra.mxu0 %v532
    %562 = vmatpush.msra.mxu0 %v531
    %563 = vmatpush.msra.mxu0 %v530
    %564 = vmatmul.f32.gmra.mxu0 %v537
    %v565 = vpop.f32.mrf.mxu0
    %v566 = vadd.f32 %v535, %v565
    %567 = vmatmul.f32.gmra.mxu0 %v540
    %v568 = vpop.f32.mrf.mxu0
    %v569 = vadd.f32 %v535, %v568
    %570 = vmatmul.f32.gmra.mxu0 %v543
    %v571 = vpop.f32.mrf.mxu0
    %v572 = vadd.f32 %v535, %v571
    %573 = vmatmul.f32.gmra.mxu0 %v546
    %v574 = vpop.f32.mrf.mxu0
    %v575 = vadd.f32 %v535, %v574
    %576 = vdwg.mxu0
    %v577 = vmax.f32 %v566, 0.0
    %v578 = vmax.f32 %v569, 0.0
    %v579 = vmax.f32 %v572, 0.0
    %v580 = vmax.f32 %v575, 0.0
    %v581 = vld [vmem:[#allocation2 + $0x168] sm:$0xff]
    %v582 = vld [vmem:[#allocation2 + $0x170] sm:$0xff]
    %v583 = vld [vmem:[#allocation2 + $0x178] sm:$0xff]
    %v584 = vld [vmem:[#allocation2 + $0x180] sm:$0xff]
    %v585 = vld [vmem:[#allocation2 + $0x188] sm:$0x1]
    %v586 = vperm.slane %v585, 0
    %v588 = vsel %vm268, %v577, 0
    %v591 = vsel %vm268, %v578, 0
    %v594 = vsel %vm268, %v579, 0
    %v597 = vsel %vm268, %v580, 0
    %599 = vmatpush.msra.mxu0 0.0
    %600 = vmatpush.msra.mxu0 0.0
    %601 = vmatpush.msra.mxu0 0.0
    %602 = vmatpush.msra.mxu0 0.0
    %603 = vmatpush.msra.mxu0 0.0
    %604 = vmatpush.msra.mxu0 0.0
    %605 = vmatpush.msra.mxu0 0.0
    %606 = vmatpush.msra.mxu0 0.0
    %607 = vmatpush.msra.mxu0 0.0
    %608 = vmatpush.msra.mxu0 0.0
    %609 = vmatpush.msra.mxu0 0.0
    %610 = vmatpush.msra.mxu0 0.0
    %611 = vmatpush.msra.mxu0 %v584
    %612 = vmatpush.msra.mxu0 %v583
    %613 = vmatpush.msra.mxu0 %v582
    %614 = vmatpush.msra.mxu0 %v581
    %615 = vmatmul.f32.gmra.mxu0 %v588
    %v616 = vpop.f32.mrf.mxu0
    %v617 = vadd.f32 %v586, %v616
    %618 = vmatmul.f32.gmra.mxu0 %v591
    %v619 = vpop.f32.mrf.mxu0
    %v620 = vadd.f32 %v586, %v619
    %621 = vmatmul.f32.gmra.mxu0 %v594
    %v622 = vpop.f32.mrf.mxu0
    %v623 = vadd.f32 %v586, %v622
    %624 = vmatmul.f32.gmra.mxu0 %v597
    %v625 = vpop.f32.mrf.mxu0
    %v626 = vadd.f32 %v586, %v625
    %627 = vdwg.mxu0
    %v628 = vld [vmem:[#allocation2 + $0x190] sm:$0xff]
    %v629 = vld [vmem:[#allocation2 + $0x198] sm:$0xff]
    %v630 = vld [vmem:[#allocation2 + $0x1a0] sm:$0xff]
    %v631 = vld [vmem:[#allocation2 + $0x1a8] sm:$0xff]
    %v632 = vld [vmem:[#allocation2 + $0x1b0] sm:$0x1]
    %v633 = vperm.slane %v632, 0
    %v635 = vsel %vm268, %v617, 0
    %v638 = vsel %vm268, %v620, 0
    %v641 = vsel %vm268, %v623, 0
    %v644 = vsel %vm268, %v626, 0
    %646 = vmatpush.msra.mxu0 0.0
    %647 = vmatpush.msra.mxu0 0.0
    %648 = vmatpush.msra.mxu0 0.0
    %649 = vmatpush.msra.mxu0 0.0
    %650 = vmatpush.msra.mxu0 0.0
    %651 = vmatpush.msra.mxu0 0.0
    %652 = vmatpush.msra.mxu0 0.0
    %653 = vmatpush.msra.mxu0 0.0
    %654 = vmatpush.msra.mxu0 0.0
    %655 = vmatpush.msra.mxu0 0.0
    %656 = vmatpush.msra.mxu0 0.0
    %657 = vmatpush.msra.mxu0 0.0
    %658 = vmatpush.msra.mxu0 %v631
    %659 = vmatpush.msra.mxu0 %v630
    %660 = vmatpush.msra.mxu0 %v629
    %661 = vmatpush.msra.mxu0 %v628
    %662 = vmatmul.f32.gmra.mxu0 %v635
    %v663 = vpop.f32.mrf.mxu0
    %v664 = vadd.f32 %v633, %v663
    %665 = vmatmul.f32.gmra.mxu0 %v638
    %v666 = vpop.f32.mrf.mxu0
    %v667 = vadd.f32 %v633, %v666
    %668 = vmatmul.f32.gmra.mxu0 %v641
    %v669 = vpop.f32.mrf.mxu0
    %v670 = vadd.f32 %v633, %v669
    %671 = vmatmul.f32.gmra.mxu0 %v644
    %v672 = vpop.f32.mrf.mxu0
    %v673 = vadd.f32 %v633, %v672
    %674 = vdwg.mxu0
    %v675 = vmax.f32 %v664, 0.0
    %v676 = vmax.f32 %v667, 0.0
    %v677 = vmax.f32 %v670, 0.0
    %v678 = vmax.f32 %v673, 0.0
    %v679 = vand.u32 2147483647, %v664
    %v680 = vand.u32 2147483647, %v667
    %v681 = vand.u32 2147483647, %v670
    %v682 = vand.u32 2147483647, %v673
    %v683 = vsub.f32 0.0, %v679
    %v684 = vsub.f32 0.0, %v680
    %v685 = vsub.f32 0.0, %v681
    %v686 = vsub.f32 0.0, %v682
    %v687 = vmul.f32 %v683, 1.442695
    %v688 = vpow.pop %v687
    %v689 = vmul.f32 %v684, 1.442695
    %v690 = vpow.pop %v689
    %v691 = vmul.f32 %v685, 1.442695
    %v692 = vpow.pop %v691
    %v693 = vmul.f32 %v686, 1.442695
    %v694 = vpow.pop %v693
    %v695 = vadd.f32 %v688, 1.0
    %v696 = vadd.f32 %v690, 1.0
    %v697 = vadd.f32 %v692, 1.0
    %v698 = vadd.f32 %v694, 1.0
    %v699 = vlog2.pop %v695
    %v700 = vmul.f32 %v699, 0.6931472
    %v701 = vlog2.pop %v696
    %v702 = vmul.f32 %v701, 0.6931472
    %v703 = vlog2.pop %v697
    %v704 = vmul.f32 %v703, 0.6931472
    %v705 = vlog2.pop %v698
    %v706 = vmul.f32 %v705, 0.6931472
    %v707 = vadd.f32 %v675, %v700
    %v708 = vadd.f32 %v676, %v702
    %v709 = vadd.f32 %v677, %v704
    %v710 = vadd.f32 %v678, %v706
    %v711 = vmul.f32 %v707, 0.9
    %v712 = vmul.f32 %v708, 0.9
    %v713 = vmul.f32 %v709, 0.9
    %v714 = vmul.f32 %v710, 0.9
    %v715 = vadd.f32 %v711, 0.1
    %v716 = vadd.f32 %v712, 0.1
    %v717 = vadd.f32 %v713, 0.1
    %v718 = vadd.f32 %v714, 0.1
    %723 = vrot.lane.b32.xlu0 %v54, 8
    %v724 = vpop.permute.xlu0 %723
    %725 = vrot.lane.b32.xlu0 %v55, 8
    %v726 = vpop.permute.xlu0 %725
    %727 = vrot.lane.b32.xlu0 %v56, 8
    %v728 = vpop.permute.xlu0 %727
    %729 = vrot.lane.b32.xlu0 %v57, 8
    %v730 = vpop.permute.xlu0 %729
    %v735 = vmul.f32 %v715, %v724
    %v736 = vmul.f32 %v716, %v726
    %v737 = vmul.f32 %v717, %v728
    %v738 = vmul.f32 %v718, %v730
    %743 = vrot.lane.b32.xlu0 %v735, 120
    %v744 = vpop.permute.xlu0 %743
    %745 = vrot.lane.b32.xlu0 %v736, 120
    %v746 = vpop.permute.xlu0 %745
    %747 = vrot.lane.b32.xlu0 %v737, 120
    %v748 = vpop.permute.xlu0 %747
    %749 = vrot.lane.b32.xlu0 %v738, 120
    %v750 = vpop.permute.xlu0 %749
    %v755 = vadd.f32 %v664, %v744
    %v756 = vadd.f32 %v667, %v746
    %v757 = vadd.f32 %v670, %v748
    %v758 = vadd.f32 %v673, %v750
    %759 = vst.msk [vmem:[%s6] sm:$0xff] %vm60, %v755
    %760 = vst.msk [vmem:[%s6 + $0x8] sm:$0xff] %vm60, %v756
    %761 = vst.msk [vmem:[%s6 + $0x10] sm:$0xff] %vm60, %v757
    %762 = vst.msk [vmem:[%s6 + $0x18] sm:$0xff] %vm60, %v758
    %s763 = scalar_lea.vmem %s6, 32
    %764 = vst.msk [vmem:[%s763] sm:$0xff] %vm60, %v664
    %765 = vst.msk [vmem:[%s763 + $0x8] sm:$0xff] %vm60, %v667
    %766 = vst.msk [vmem:[%s763 + $0x10] sm:$0xff] %vm60, %v670
    %767 = vst.msk [vmem:[%s763 + $0x18] sm:$0xff] %vm60, %v673
    %772 = vrot.lane.b32.xlu0 %v715, 120
    %v773 = vpop.permute.xlu0 %772
    %774 = vrot.lane.b32.xlu0 %v716, 120
    %v775 = vpop.permute.xlu0 %774
    %776 = vrot.lane.b32.xlu0 %v717, 120
    %v777 = vpop.permute.xlu0 %776
    %778 = vrot.lane.b32.xlu0 %v718, 120
    %v779 = vpop.permute.xlu0 %778
    %s784 = scalar_lea.vmem %s6, 64
    %785 = vst.msk [vmem:[%s784] sm:$0xff] %vm60, %v773
    %786 = vst.msk [vmem:[%s784 + $0x8] sm:$0xff] %vm60, %v775
    %787 = vst.msk [vmem:[%s784 + $0x10] sm:$0xff] %vm60, %v777
    %788 = vst.msk [vmem:[%s784 + $0x18] sm:$0xff] %vm60, %v779
    %vm789 = vcmask 254976
    %790 = vst.msk [vmem:[%s7] sm:$0x3] %vm789, %v356
    %s791 = scalar_lea.vmem %s7, 2
    %792 = vst.msk [vmem:[%s791] sm:$0x3] %vm789, %v324
    %794 = vrot.lane.b32.xlu0 %v346, 96
    %v795 = vpop.permute.xlu0 %794
    %s797 = scalar_lea.vmem %s7, 4
    %798 = vst.msk [vmem:[%s797] sm:$0x3] %vm789, %v795
    // Predicated region
    $region30: #{neural_process_forward.1} parent=1 // pred_check
      _
    $region31: #{neural_process_forward.1} parent=1 // pred_check_branch
      %800 = sbr.rel (0) target = $region33
    $region32: #{neural_process_forward.1} parent=1 // pred_region
      _
    $region33: #{neural_process_forward.1} parent=1 // pred_fallthru
      _
    // Predicated region
    $region34: #{neural_process_forward.1} parent=1 // pred_check
      _
    $region35: #{neural_process_forward.1} parent=1 // pred_check_branch
      %802 = sbr.rel (0) target = $region37
    $region36: #{neural_process_forward.1} parent=1 // pred_region
      _
    $region37: #{neural_process_forward.1} parent=1 // pred_fallthru
      _
    // Predicated region
    $region38: #{neural_process_forward.1} parent=1 // pred_check
      _
    $region39: #{neural_process_forward.1} parent=1 // pred_check_branch
      %804 = sbr.rel (0) target = $region41
    $region40: #{neural_process_forward.1} parent=1 // pred_region
      _
    $region41: #{neural_process_forward.1} parent=1 // pred_fallthru
      _
    // Predicated region
    $region42: #{neural_process_forward.1} parent=1 // pred_check
      _
    $region43: #{neural_process_forward.1} parent=1 // pred_check_branch
      %806 = sbr.rel (0) target = $region45
    $region44: #{neural_process_forward.1} parent=1 // pred_region
      _
    $region45: #{neural_process_forward.1} parent=1 // pred_fallthru
      _
    %807 = vsyncpa [#allocation3], 1

</llo_original>
